<compile_context>
chip_gen: v7x
topology: tpu7x:2x2x1
jax: 0.10.0
libtpu: 0.0.40
codegen_flags: <defaults>
</compile_context>

<pallas_src>
import functools

import jax
import jax.numpy as jnp
from jax.experimental import pallas as pl
from jax.experimental.pallas import tpu as pltpu

DIM = 2  # self.dim in the module

_ACT = {
    'relu': lambda x: jnp.maximum(x, 0.0),
    'sigmoid': jax.nn.sigmoid,
    'elu': jax.nn.elu,
    'tanh': jnp.tanh,
    'gelu': jax.nn.gelu,
    'silu': jax.nn.silu,
    'softplus': jax.nn.softplus,
    'leaky_relu': lambda x: jnp.where(x >= 0, x, 0.01 * x),
}


def _round_up(x, m):
    return m * (-(-int(x) // m))


def _nice_mlp_kernel(x_ref, *refs, act_name, n_layers):
    """Fused MLP forward for one batch chunk.

    x_ref       : (bb, K0)  raw [ueps_dot, uel] rows (normalization folded in W0)
    refs[:L]    : per-layer weight slabs (K_i, PAD); first/last have the
                  Normalize / DeNormalize affines folded in
    refs[L]     : (L, 1, PAD) bias slab (folded)
    refs[L+1]   : (bb, PAD) lane-dense output block (first DIM cols valid)
    """
    ws = refs[:n_layers]
    b_ref = refs[n_layers]
    out_ref = refs[n_layers + 1]
    act = _ACT[act_name]

    h = jnp.dot(x_ref[...], ws[0][...],
                preferred_element_type=jnp.float32) + b_ref[0]
    for li in range(1, n_layers):
        h = act(h)
        k = ws[li].shape[0]  # true (8-rounded) contraction width of this layer
        h = jnp.dot(h[:, :k], ws[li][...],
                    preferred_element_type=jnp.float32) + b_ref[li]
    out_ref[...] = h


def prepare_params(params, norm):
    """One-time prep: fold Normalize/DeNormalize into the first/last Linear
    layers and pack weights/biases into (8-rounded rows, 128-rounded lanes)
    zero-padded slabs.  Cache the result across forward calls."""
    prm_ee, prm_de, prm_dee, _ = norm
    weights = [jnp.asarray(w, jnp.float32) for w in params['weights']]
    biases = [jnp.asarray(b, jnp.float32).reshape(-1) for b in params['biases']]
    act = params['act']
    n_layers = len(weights)
    assert n_layers >= 2, "expects at least one hidden layer (params_evolution)"

    ee_scale, ee_shift = prm_ee[0], prm_ee[1]
    de_scale, de_shift = prm_de[0], prm_de[1]
    dee_scale, dee_shift = prm_dee[0], prm_dee[1]

    # Input x = concat([ueps_dot, uel]); normalized input is (x - shift)/scale.
    in_scale = jnp.concatenate([de_scale, ee_scale])   # (2*DIM,)
    in_shift = jnp.concatenate([de_shift, ee_shift])   # (2*DIM,)
    W0, b0 = weights[0], biases[0]                     # (2*DIM, H1), (H1,)
    W0f = W0 / in_scale[:, None]
    b0f = b0 - (in_shift / in_scale) @ W0

    # Output DeNormalize: y = out * scale + shift folded into the last layer.
    WL, bL = weights[-1], biases[-1]                   # (H_last, DIM), (DIM,)
    WLf = WL * dee_scale[None, :]
    bLf = bL * dee_scale + dee_shift

    folded_w = [W0f] + weights[1:-1] + [WLf]
    folded_b = [b0f] + biases[1:-1] + [bLf]

    lane_pad = _round_up(max(int(w.shape[1]) for w in folded_w), 128)

    w_slabs = []
    for w in folded_w:
        rows = _round_up(int(w.shape[0]), 8)           # sublane pad only to 8
        slab = (jnp.zeros((rows, lane_pad), jnp.float32)
                .at[:w.shape[0], :w.shape[1]].set(w))  # zero-filled padding!
        w_slabs.append(slab)

    b_slab = jnp.zeros((n_layers, 1, lane_pad), jnp.float32)
    for i, b in enumerate(folded_b):
        b_slab = b_slab.at[i, 0, :b.shape[0]].set(b)

    return tuple(w_slabs), b_slab, act, n_layers, lane_pad


def nice_reduced_forward_fused(t_list, ys, eps_dot, prepped, prm_dt,
                               block_b=512):
    """Evaluate NICE_reduced.forward(t_k, y_k) for all k in ONE pallas_call.

    t_list  : list of concrete Python time scalars (as odeint supplies them)
    ys      : (T_steps, N, >=DIM) per-step ODE states
    eps_dot : (T_total, N, DIM)   stored strain rates
    """
    w_slabs, b_slab, act, n_layers, lane_pad = prepped
    t_total = eps_dot.shape[0]
    t_steps = len(t_list)
    n = ys.shape[1]

    # PyTorch time-index semantics (eps_dot[-1] if t > 1.0 else eps_dot[int(t/dt)],
    # with Python float truncation), gathered on the wrapper side.
    idxs = [(t_total - 1) if t > 1.0 else int(t / prm_dt) for t in t_list]
    eps_sel = jnp.take(eps_dot, jnp.asarray(idxs, jnp.int32), axis=0)  # (T,N,DIM)

    uel = ys[:, :, :DIM]                                               # (T,N,DIM)
    x = jnp.concatenate([eps_sel, uel], axis=-1).reshape(t_steps * n, 2 * DIM)

    batch = x.shape[0]
    k0 = w_slabs[0].shape[0]                 # 8-rounded input width
    bb = min(_round_up(batch, 8), block_b)   # batch chunk (sublane-aligned)
    b_pad = _round_up(batch, bb)
    x_pad = jnp.zeros((b_pad, k0), jnp.float32).at[:batch, :2 * DIM].set(x)

    kernel = functools.partial(_nice_mlp_kernel, act_name=act, n_layers=n_layers)

    in_specs = [pl.BlockSpec((bb, k0), lambda i: (i, 0))]
    for w in w_slabs:
        # constant block index -> weights DMA'd once, resident across the grid
        in_specs.append(pl.BlockSpec(w.shape, lambda i: (0, 0)))
    in_specs.append(pl.BlockSpec(b_slab.shape, lambda i: (0, 0, 0)))

    out_pad = pl.pallas_call(
        kernel,
        out_shape=jax.ShapeDtypeStruct((b_pad, lane_pad), jnp.float32),
        grid_spec=pltpu.PrefetchScalarGridSpec(
            num_scalar_prefetch=0,
            grid=(b_pad // bb,),
            in_specs=in_specs,
            out_specs=pl.BlockSpec((bb, lane_pad), lambda i: (i, 0)),
        ),
        compiler_params=pltpu.CompilerParams(
            dimension_semantics=("parallel",)),
    )(x_pad, *w_slabs, b_slab)

    return out_pad[:batch, :DIM].reshape(t_steps, n, DIM)


def nice_reduced_forward(t, y, eps_dot, prepped, prm_dt):
    """Single-call mirror of NICE_reduced.forward (inference == False branch).
    Takes the cached prepare_params() output (do NOT rebuild slabs per call)."""
    return nice_reduced_forward_fused([t], y[None], eps_dot, prepped, prm_dt)[0]


def init_mlp(key, i_dim, o_dim, h_dims):
    """Deterministic PyTorch-Linear-style init; weights stored as [in, out]."""
    dims = [i_dim] + list(h_dims) + [o_dim]
    weights, biases = [], []
    for fan_in, fan_out in zip(dims[:-1], dims[1:]):
        key, kw, kb = jax.random.split(key, 3)
        bound = 1.0 / jnp.sqrt(jnp.float32(fan_in))
        weights.append(jax.random.uniform(kw, (fan_in, fan_out), jnp.float32,
                                          -bound, bound))
        biases.append(jax.random.uniform(kb, (1, fan_out), jnp.float32,
                                         -bound, bound))
    return weights, biases


if __name__ == "__main__":
    key = jax.random.PRNGKey(0)
    N = 8                        # number of trajectories / ICs (number_IC)
    T_TOTAL = 16                 # number of stored strain-rate time steps
    HIDDEN = (32, 32)            # params_evolution hidden layers
    ACT = 'tanh'                 # params_evolution activation
    DT = 0.1

    k_y, k_eps, k_es, k_eb, k_ds, kmlp = jax.random.split(key, 6)

    # Batch of forward evaluations (one per ODE time step), incl. t > 1.0 branch.
    ts = [0.0, 0.15, 0.35, 0.7, 0.95, 1.2]
    T_STEPS = len(ts)

    # Per-step states: first DIM columns are elastic strain, extras unused.
    ys = jax.random.normal(k_y, (T_STEPS, N, DIM + 2), jnp.float32)
    eps_dot = jax.random.normal(k_eps, (T_TOTAL, N, DIM), jnp.float32)

    # norm_params: each prm_* is (2, DIM) = [scale; shift]
    prm_e = jnp.stack([jax.random.uniform(k_es, (DIM,), jnp.float32, 0.5, 1.5),
                       jax.random.uniform(k_eb, (DIM,), jnp.float32, -0.1, 0.1)])
    prm_de = jnp.stack([jax.random.uniform(k_ds, (DIM,), jnp.float32, 0.5, 1.5),
                        jnp.zeros((DIM,), jnp.float32)])
    frac = 0.5
    prm_ee = prm_e * frac        # self.prm_ee = self.prm_e * frac
    prm_dee = prm_de * frac      # self.prm_dee = self.prm_de * frac
    norm = (prm_ee, prm_de, prm_dee, DT)

    # params_evolution = [2*dim, dim, HIDDEN, ACT]
    weights, biases = init_mlp(kmlp, 2 * DIM, DIM, HIDDEN)
    params = {'weights': weights, 'biases': biases, 'act': ACT}

    # TODO(synk): NeuralNetEnergy / stress() needs autograd of the energy net
    # (torch.autograd.grad), and the inference==True SciPy-interp branch is
    # host-side; only the forward() evolution path is kernelized.

    prepped = prepare_params(params, norm)   # cached: build slabs ONCE

    # Fused multi-step evaluation: ONE pallas_call, one matmul batch.
    out_fused = jax.block_until_ready(
        nice_reduced_forward_fused(ts, ys, eps_dot, prepped, DT))

    # Single-step module-style API (same kernel, reuses cached slabs).
    out_single = jax.block_until_ready(
        nice_reduced_forward(ts[2], ys[2], eps_dot, prepped, DT))

    # Pure-JAX reference with the ORIGINAL (unfolded) op order.
    def ref_forward(t, y):
        uel = y[:, :DIM]
        ueps = eps_dot[-1] if t > 1.0 else eps_dot[int(t / DT)]
        nel = (uel - prm_ee[1]) / prm_ee[0]
        neps = (ueps - prm_de[1]) / prm_de[0]
        x = jnp.concatenate([neps, nel], axis=-1)
        for li, (w, b) in enumerate(zip(weights, biases)):
            x = x @ w + b
            if li < len(weights) - 1:
                x = _ACT[ACT](x)
        return x[:, :DIM] * prm_dee[0] + prm_dee[1]

    refs = jnp.stack([ref_forward(t, ys[i]) for i, t in enumerate(ts)])

    assert out_fused.shape == (T_STEPS, N, DIM)
    assert jnp.allclose(out_fused, refs, atol=1e-4, rtol=1e-4)
    assert jnp.allclose(out_single, refs[2], atol=1e-4, rtol=1e-4)
    print("KERNEL_OK")
</pallas_src>

<mosaic_0001>
module attributes {stable_mosaic.version = 11 : i64} {
  func.func @_nice_mlp_kernel(%arg0: i32, %arg1: memref<48x8xf32, #tpu.memory_space<vmem>>, %arg2: memref<8x128xf32, #tpu.memory_space<vmem>>, %arg3: memref<32x128xf32, #tpu.memory_space<vmem>>, %arg4: memref<32x128xf32, #tpu.memory_space<vmem>>, %arg5: memref<3x1x128xf32, #tpu.memory_space<vmem>>, %arg6: memref<48x128xf32, #tpu.memory_space<vmem>>) attributes {dimension_semantics = [#tpu.dimension_semantics<parallel>], iteration_bounds = array<i64: 1>, scalar_prefetch = 0 : i64, scratch_operands = 0 : i64, tpu.core_type = #tpu.core_type<tc>, window_params = [{transform_indices = @transform_0, window_bounds = array<i64: 48, 8>}, {pipeline_mode = #tpu.pipeline_mode<synchronous>, transform_indices = @transform_1, window_bounds = array<i64: 8, 128>}, {pipeline_mode = #tpu.pipeline_mode<synchronous>, transform_indices = @transform_2, window_bounds = array<i64: 32, 128>}, {pipeline_mode = #tpu.pipeline_mode<synchronous>, transform_indices = @transform_3, window_bounds = array<i64: 32, 128>}, {pipeline_mode = #tpu.pipeline_mode<synchronous>, transform_indices = @transform_4, window_bounds = array<i64: 3, 1, 128>}, {transform_indices = @transform_5, window_bounds = array<i64: 48, 128>}]} {
    %c0 = arith.constant 0 : index
    %c0_0 = arith.constant 0 : index
    %0 = vector.load %arg1[%c0, %c0_0] : memref<48x8xf32, #tpu.memory_space<vmem>>, vector<48x8xf32>
    %c0_1 = arith.constant 0 : index
    %c0_2 = arith.constant 0 : index
    %1 = vector.load %arg2[%c0_1, %c0_2] : memref<8x128xf32, #tpu.memory_space<vmem>>, vector<8x128xf32>
    %cst = arith.constant dense<0.000000e+00> : vector<48x128xf32>
    %2 = tpu.matmul %0, %1, %cst {dimension_numbers = #tpu.dot_dimension_numbers<[1], [0], [0], [1], [0, 0, 1, 1], [], []>} : vector<48x8xf32>, vector<8x128xf32>, vector<48x128xf32> -> vector<48x128xf32>
    %c0_3 = arith.constant 0 : index
    %c0_4 = arith.constant 0 : index
    %c0_5 = arith.constant 0 : index
    %3 = vector.load %arg5[%c0_3, %c0_4, %c0_5] : memref<3x1x128xf32, #tpu.memory_space<vmem>>, vector<1x1x128xf32>
    %4 = vector.shape_cast %3 : vector<1x1x128xf32> to vector<1x128xf32>
    %5 = vector.broadcast %4 : vector<1x128xf32> to vector<48x128xf32>
    %6 = arith.addf %2, %5 : vector<48x128xf32>
    %7 = math.tanh %6 : vector<48x128xf32>
    %8 = vector.extract_strided_slice %7 {offsets = [0, 0], sizes = [48, 32], strides = [1, 1]} : vector<48x128xf32> to vector<48x32xf32>
    %c0_6 = arith.constant 0 : index
    %c0_7 = arith.constant 0 : index
    %9 = vector.load %arg3[%c0_6, %c0_7] : memref<32x128xf32, #tpu.memory_space<vmem>>, vector<32x128xf32>
    %cst_8 = arith.constant dense<0.000000e+00> : vector<48x128xf32>
    %10 = tpu.matmul %8, %9, %cst_8 {dimension_numbers = #tpu.dot_dimension_numbers<[1], [0], [0], [1], [0, 0, 1, 1], [], []>} : vector<48x32xf32>, vector<32x128xf32>, vector<48x128xf32> -> vector<48x128xf32>
    %c1 = arith.constant 1 : index
    %c0_9 = arith.constant 0 : index
    %c0_10 = arith.constant 0 : index
    %11 = vector.load %arg5[%c1, %c0_9, %c0_10] : memref<3x1x128xf32, #tpu.memory_space<vmem>>, vector<1x1x128xf32>
    %12 = vector.shape_cast %11 : vector<1x1x128xf32> to vector<1x128xf32>
    %13 = vector.broadcast %12 : vector<1x128xf32> to vector<48x128xf32>
    %14 = arith.addf %10, %13 : vector<48x128xf32>
    %15 = math.tanh %14 : vector<48x128xf32>
    %16 = vector.extract_strided_slice %15 {offsets = [0, 0], sizes = [48, 32], strides = [1, 1]} : vector<48x128xf32> to vector<48x32xf32>
    %c0_11 = arith.constant 0 : index
    %c0_12 = arith.constant 0 : index
    %17 = vector.load %arg4[%c0_11, %c0_12] : memref<32x128xf32, #tpu.memory_space<vmem>>, vector<32x128xf32>
    %cst_13 = arith.constant dense<0.000000e+00> : vector<48x128xf32>
    %18 = tpu.matmul %16, %17, %cst_13 {dimension_numbers = #tpu.dot_dimension_numbers<[1], [0], [0], [1], [0, 0, 1, 1], [], []>} : vector<48x32xf32>, vector<32x128xf32>, vector<48x128xf32> -> vector<48x128xf32>
    %c2 = arith.constant 2 : index
    %c0_14 = arith.constant 0 : index
    %c0_15 = arith.constant 0 : index
    %19 = vector.load %arg5[%c2, %c0_14, %c0_15] : memref<3x1x128xf32, #tpu.memory_space<vmem>>, vector<1x1x128xf32>
    %20 = vector.shape_cast %19 : vector<1x1x128xf32> to vector<1x128xf32>
    %21 = vector.broadcast %20 : vector<1x128xf32> to vector<48x128xf32>
    %22 = arith.addf %18, %21 : vector<48x128xf32>
    %c0_16 = arith.constant 0 : index
    %c0_17 = arith.constant 0 : index
    %23 = vector.load %arg6[%c0_16, %c0_17] : memref<48x128xf32, #tpu.memory_space<vmem>>, vector<48x128xf32>
    tpu.vector_store %arg6[%c0_16, %c0_17], %22 {strides = array<i32>} : memref<48x128xf32, #tpu.memory_space<vmem>>, vector<48x128xf32>,
    return
  }
  func.func @transform_0(%arg0: i32) -> (i32, i32) {
    %c0_i32 = arith.constant 0 : i32
    %c0_i32_0 = arith.constant 0 : i32
    return %arg0, %c0_i32 : i32, i32
  }
  func.func @transform_1(%arg0: i32) -> (i32, i32) {
    %c0_i32 = arith.constant 0 : i32
    %c0_i32_0 = arith.constant 0 : i32
    %c0_i32_1 = arith.constant 0 : i32
    return %c0_i32, %c0_i32_0 : i32, i32
  }
  func.func @transform_2(%arg0: i32) -> (i32, i32) {
    %c0_i32 = arith.constant 0 : i32
    %c0_i32_0 = arith.constant 0 : i32
    %c0_i32_1 = arith.constant 0 : i32
    return %c0_i32, %c0_i32_0 : i32, i32
  }
  func.func @transform_3(%arg0: i32) -> (i32, i32) {
    %c0_i32 = arith.constant 0 : i32
    %c0_i32_0 = arith.constant 0 : i32
    %c0_i32_1 = arith.constant 0 : i32
    return %c0_i32, %c0_i32_0 : i32, i32
  }
  func.func @transform_4(%arg0: i32) -> (i32, i32, i32) {
    %c0_i32 = arith.constant 0 : i32
    %c0_i32_0 = arith.constant 0 : i32
    %c0_i32_1 = arith.constant 0 : i32
    %c0_i32_2 = arith.constant 0 : i32
    return %c0_i32, %c0_i32_0, %c0_i32_1 : i32, i32, i32
  }
  func.func @transform_5(%arg0: i32) -> (i32, i32) {
    %c0_i32 = arith.constant 0 : i32
    %c0_i32_0 = arith.constant 0 : i32
    return %arg0, %c0_i32 : i32, i32
  }
}

</mosaic_0001>

<llo_original>
// kernel: tpu_custom_call.1
$region0: #{tpu_custom_call.1}
  #allocation0 [shape = 'u32[]', space=smem, size = 0x4, offset = 0x4, fixed_abs, tag = 'smem constant byte address 0x4 - core index']
  #allocation1 [shape = 'u32[144,128]{1,0:T(1,128)}', space=vmem, size = 0x12000, scoped, tag = 'internal scratch']
  %s0 = inlined_call_operand.vmem [shape: f32[48,8], index: 0, kind: input, shape index: {}]
  %s1 = inlined_call_operand.hbm [shape: f32[8,128], index: 1, kind: input, shape index: {}]
  %s2 = inlined_call_operand.vmem [shape: f32[32,128], index: 2, kind: input, shape index: {}]
  %s3 = inlined_call_operand.vmem [shape: f32[32,128], index: 3, kind: input, shape index: {}]
  %s4 = inlined_call_operand.vmem [shape: f32[3,1,128], index: 4, kind: input, shape index: {}]
  %s5 = inlined_call_operand.hbm [shape: f32[48,128], index: 5, kind: output, shape index: {}]
  %s6 = sld [smem:[#allocation0]]
  $region34: #{tpu_custom_call.1} parent=0
    _
  %s8 = ssub.s32 1, %s6
  %s9 = scalar_select 0, %s8, %s6
  $region1: #{tpu_custom_call.1} parent=0
    #allocation2 [shape = 'u8[4096]{0}', space=vmem, size = 0x1000, scoped, tag = 'input window, operand 1, single buffered']
    #allocation3 [shape = 's32[1]{0}', space=sflag, size = 0x4, scoped, tag = 'scoped memory for tpu_custom_call.1']
    #allocation4 [shape = 's32[1]{0}', space=sflag, size = 0x4, scoped, tag = 'scoped memory for tpu_custom_call.1']
    #allocation5 [shape = 'u8[24576]{0}', space=vmem, size = 0x6000, scoped, tag = 'output window, operand 0, single buffered']
    %10 = vsyncpa [#allocation3], 0
    %11 = vsyncpa [#allocation4], 0
    // Predicated region
    $region2: #{tpu_custom_call.1} parent=1 // pred_check
      _
    $region3: #{tpu_custom_call.1} parent=1 // pred_check_branch
      %13 = sbr.rel (0) target = $region5
    $region4: #{tpu_custom_call.1} parent=1 // pred_region
      _
    $region5: #{tpu_custom_call.1} parent=1 // pred_fallthru
      _
    // Predicated region
    $region6: #{tpu_custom_call.1} parent=1 // pred_check
      _
    $region7: #{tpu_custom_call.1} parent=1 // pred_check_branch
      %15 = sbr.rel (0) target = $region9
    $region8: #{tpu_custom_call.1} parent=1 // pred_region
      %s17 = ssub.s32 128, 128
      %18 = vsyncadd [#allocation3], %s17
      %s20 = sshll.u32 [#allocation2], 4
      %s21 = int_to_ptr.vmem [resolvable:$true] %s20
      %23 = dma.hbm_to_vmem [thread:$0]  %s1, 128, %s21, [#allocation3]
    $region9: #{tpu_custom_call.1} parent=1 // pred_fallthru
      _
    // Predicated region
    $region10: #{tpu_custom_call.1} parent=1 // pred_check
      _
    $region11: #{tpu_custom_call.1} parent=1 // pred_check_branch
      %25 = sbr.rel (0) target = $region13
    $region12: #{tpu_custom_call.1} parent=1 // pred_region
      _
    $region13: #{tpu_custom_call.1} parent=1 // pred_fallthru
      _
    // Predicated region
    $region14: #{tpu_custom_call.1} parent=1 // pred_check
      _
    $region15: #{tpu_custom_call.1} parent=1 // pred_check_branch
      %27 = sbr.rel (0) target = $region17
    $region16: #{tpu_custom_call.1} parent=1 // pred_region
      _
    $region17: #{tpu_custom_call.1} parent=1 // pred_fallthru
      _
    // Predicated region
    $region18: #{tpu_custom_call.1} parent=1 // pred_check
      _
    $region19: #{tpu_custom_call.1} parent=1 // pred_check_branch
      %29 = sbr.rel (0) target = $region21
    $region20: #{tpu_custom_call.1} parent=1 // pred_region
      _
    $region21: #{tpu_custom_call.1} parent=1 // pred_fallthru
      _
    // Predicated region
    $region22: #{tpu_custom_call.1} parent=1 // pred_check
      _
    $region23: #{tpu_custom_call.1} parent=1 // pred_check_branch
      %31 = sbr.rel (0) target = $region25
    $region24: #{tpu_custom_call.1} parent=1 // pred_region
      %32 = dma.done [#allocation3], 128
    $region25: #{tpu_custom_call.1} parent=1 // pred_fallthru
      _
    %v33 = vld [vmem:[%s0] sm:$0xff]
    %v34 = vld [vmem:[%s0 + $0x8] sm:$0xff]
    %v35 = vld [vmem:[%s0 + $0x10] sm:$0xff]
    %v36 = vld [vmem:[%s0 + $0x18] sm:$0xff]
    %v37 = vld [vmem:[%s0 + $0x20] sm:$0xff]
    %v38 = vld [vmem:[%s0 + $0x28] sm:$0xff]
    %v39 = vld [vmem:[#allocation2] sm:$0xff]
    %v40 = vld [vmem:[%s4] sm:$0x1]
    %v42 = vlaneseq
    %v43 = vshrl.u32 %v42, 7
    %v44 = vsub.s32 0, %v43
    %v45 = vrot.slane %v40, %v44
    %vm47 = vcmask 64512
    %v49 = vsel %vm47, %v33, 0
    %v52 = vsel %vm47, %v34, 0
    %v55 = vsel %vm47, %v35, 0
    %v58 = vsel %vm47, %v36, 0
    %v61 = vsel %vm47, %v37, 0
    %v64 = vsel %vm47, %v38, 0
    %66 = vmatprep.subr.mxu0 0.0
    %67 = vmatpush1.msra.mxu0 %v39
    %68 = vmatprep.subr.mxu0 0.0
    %69 = vmatpush1.msra.mxu0 0.0
    %70 = vmatprep.subr.mxu0 0.0
    %71 = vmatpush1.msra.mxu0 0.0
    %72 = vmatprep.subr.mxu0 0.0
    %73 = vmatpush1.msra.mxu0 0.0
    %74 = vmatprep.subr.mxu0 0.0
    %75 = vmatpush1.msra.mxu0 0.0
    %76 = vmatprep.subr.mxu0 0.0
    %77 = vmatpush1.msra.mxu0 0.0
    %78 = vmatprep.subr.mxu0 0.0
    %79 = vmatpush1.msra.mxu0 0.0
    %80 = vmatprep.subr.mxu0 0.0
    %81 = vmatpush1.msra.mxu0 0.0
    %82 = vmatprep.subr.mxu0 0.0
    %83 = vmatpush1.msra.mxu0 0.0
    %84 = vmatprep.subr.mxu0 0.0
    %85 = vmatpush1.msra.mxu0 0.0
    %86 = vmatprep.subr.mxu0 0.0
    %87 = vmatpush1.msra.mxu0 0.0
    %88 = vmatprep.subr.mxu0 0.0
    %89 = vmatpush1.msra.mxu0 0.0
    %90 = vmatprep.subr.mxu0 0.0
    %91 = vmatpush1.msra.mxu0 0.0
    %92 = vmatprep.subr.mxu0 0.0
    %93 = vmatpush1.msra.mxu0 0.0
    %94 = vmatprep.subr.mxu0 0.0
    %95 = vmatpush1.msra.mxu0 0.0
    %96 = vmatprep.subr.mxu0 0.0
    %97 = vmatpush1.msra.mxu0 0.0
    %98 = vmatprep.subr.mxu0 0.0
    %99 = vmatpush1.msra.mxu0 0.0
    %100 = vmatprep.subr.mxu0 0.0
    %101 = vmatpush1.msra.mxu0 0.0
    %102 = vmatprep.subr.mxu0 0.0
    %103 = vmatpush1.msra.mxu0 0.0
    %104 = vmatprep.subr.mxu0 0.0
    %105 = vmatpush1.msra.mxu0 0.0
    %106 = vmatprep.subr.mxu0 0.0
    %107 = vmatpush1.msra.mxu0 0.0
    %108 = vmatprep.subr.mxu0 0.0
    %109 = vmatpush1.msra.mxu0 0.0
    %110 = vmatprep.subr.mxu0 0.0
    %111 = vmatpush1.msra.mxu0 0.0
    %112 = vmatprep.subr.mxu0 0.0
    %113 = vmatpush1.msra.mxu0 0.0
    %114 = vmatprep.subr.mxu0 0.0
    %115 = vmatpush1.msra.mxu0 0.0
    %116 = vmatprep.subr.mxu0 0.0
    %117 = vmatpush1.msra.mxu0 0.0
    %118 = vmatprep.subr.mxu0 0.0
    %119 = vmatpush1.msra.mxu0 0.0
    %120 = vmatprep.subr.mxu0 0.0
    %121 = vmatpush1.msra.mxu0 0.0
    %122 = vmatprep.subr.mxu0 0.0
    %123 = vmatpush1.msra.mxu0 0.0
    %124 = vmatprep.subr.mxu0 0.0
    %125 = vmatpush1.msra.mxu0 0.0
    %126 = vmatprep.subr.mxu0 0.0
    %127 = vmatpush1.msra.mxu0 0.0
    %128 = vmatprep.subr.mxu0 0.0
    %129 = vmatpush1.msra.mxu0 0.0
    %130 = vmatprep.mubr.f32.mxu0 0.0
    %131 = vmatmul.mubr.f32.gmra.mrb[0].mxu0 %v49
    %v132 = vpop.f32.mrb[0].mxu0
    %v133 = vadd.f32 %v45, %v132
    %v134 = vpop.f32.mrb[0].mxu0
    %135 = vmatprep.mubr.f32.mxu0 0.0
    %136 = vmatmul.mubr.f32.gmra.mrb[0].mxu0 %v52
    %v137 = vpop.f32.mrb[0].mxu0
    %v138 = vadd.f32 %v45, %v137
    %v139 = vpop.f32.mrb[0].mxu0
    %140 = vmatprep.mubr.f32.mxu0 0.0
    %141 = vmatmul.mubr.f32.gmra.mrb[0].mxu0 %v55
    %v142 = vpop.f32.mrb[0].mxu0
    %v143 = vadd.f32 %v45, %v142
    %v144 = vpop.f32.mrb[0].mxu0
    %145 = vmatprep.mubr.f32.mxu0 0.0
    %146 = vmatmul.mubr.f32.gmra.mrb[0].mxu0 %v58
    %v147 = vpop.f32.mrb[0].mxu0
    %v148 = vadd.f32 %v45, %v147
    %v149 = vpop.f32.mrb[0].mxu0
    %150 = vmatprep.mubr.f32.mxu0 0.0
    %151 = vmatmul.mubr.f32.gmra.mrb[0].mxu0 %v61
    %v152 = vpop.f32.mrb[0].mxu0
    %v153 = vadd.f32 %v45, %v152
    %v154 = vpop.f32.mrb[0].mxu0
    %155 = vmatprep.mubr.f32.mxu0 0.0
    %156 = vmatmul.mubr.f32.gmra.mrb[0].mxu0 %v64
    %v157 = vpop.f32.mrb[0].mxu0
    %v158 = vadd.f32 %v45, %v157
    %v159 = vpop.f32.mrb[0].mxu0
    %160 = vdwg.mxu0
    %v161 = vtanh.pop %v133
    %v162 = vtanh.pop %v138
    %v163 = vtanh.pop %v143
    %v164 = vtanh.pop %v148
    %v165 = vtanh.pop %v153
    %v166 = vtanh.pop %v158
    %v167 = vld [vmem:[%s2] sm:$0xff]
    %v168 = vld [vmem:[%s2 + $0x8] sm:$0xff]
    %v169 = vld [vmem:[%s2 + $0x10] sm:$0xff]
    %v170 = vld [vmem:[%s2 + $0x18] sm:$0xff]
    %s171 = scalar_lea.vmem %s4, 1
    %v172 = vld [vmem:[%s171] sm:$0x1]
    %v174 = vlaneseq
    %v175 = vshrl.u32 %v174, 7
    %v176 = vsub.s32 0, %v175
    %v177 = vrot.slane %v172, %v176
    %vm179 = vcmask 261120
    %v181 = vsel %vm179, %v161, 0
    %v184 = vsel %vm179, %v162, 0
    %v187 = vsel %vm179, %v163, 0
    %v190 = vsel %vm179, %v164, 0
    %v193 = vsel %vm179, %v165, 0
    %v196 = vsel %vm179, %v166, 0
    %198 = vmatprep.subr.mxu0 0.0
    %199 = vmatpush1.msra.mxu0 %v167
    %200 = vmatprep.subr.mxu0 0.0
    %201 = vmatpush1.msra.mxu0 %v168
    %202 = vmatprep.subr.mxu0 0.0
    %203 = vmatpush1.msra.mxu0 %v169
    %204 = vmatprep.subr.mxu0 0.0
    %205 = vmatpush1.msra.mxu0 %v170
    %206 = vmatprep.subr.mxu0 0.0
    %207 = vmatpush1.msra.mxu0 0.0
    %208 = vmatprep.subr.mxu0 0.0
    %209 = vmatpush1.msra.mxu0 0.0
    %210 = vmatprep.subr.mxu0 0.0
    %211 = vmatpush1.msra.mxu0 0.0
    %212 = vmatprep.subr.mxu0 0.0
    %213 = vmatpush1.msra.mxu0 0.0
    %214 = vmatprep.subr.mxu0 0.0
    %215 = vmatpush1.msra.mxu0 0.0
    %216 = vmatprep.subr.mxu0 0.0
    %217 = vmatpush1.msra.mxu0 0.0
    %218 = vmatprep.subr.mxu0 0.0
    %219 = vmatpush1.msra.mxu0 0.0
    %220 = vmatprep.subr.mxu0 0.0
    %221 = vmatpush1.msra.mxu0 0.0
    %222 = vmatprep.subr.mxu0 0.0
    %223 = vmatpush1.msra.mxu0 0.0
    %224 = vmatprep.subr.mxu0 0.0
    %225 = vmatpush1.msra.mxu0 0.0
    %226 = vmatprep.subr.mxu0 0.0
    %227 = vmatpush1.msra.mxu0 0.0
    %228 = vmatprep.subr.mxu0 0.0
    %229 = vmatpush1.msra.mxu0 0.0
    %230 = vmatprep.subr.mxu0 0.0
    %231 = vmatpush1.msra.mxu0 0.0
    %232 = vmatprep.subr.mxu0 0.0
    %233 = vmatpush1.msra.mxu0 0.0
    %234 = vmatprep.subr.mxu0 0.0
    %235 = vmatpush1.msra.mxu0 0.0
    %236 = vmatprep.subr.mxu0 0.0
    %237 = vmatpush1.msra.mxu0 0.0
    %238 = vmatprep.subr.mxu0 0.0
    %239 = vmatpush1.msra.mxu0 0.0
    %240 = vmatprep.subr.mxu0 0.0
    %241 = vmatpush1.msra.mxu0 0.0
    %242 = vmatprep.subr.mxu0 0.0
    %243 = vmatpush1.msra.mxu0 0.0
    %244 = vmatprep.subr.mxu0 0.0
    %245 = vmatpush1.msra.mxu0 0.0
    %246 = vmatprep.subr.mxu0 0.0
    %247 = vmatpush1.msra.mxu0 0.0
    %248 = vmatprep.subr.mxu0 0.0
    %249 = vmatpush1.msra.mxu0 0.0
    %250 = vmatprep.subr.mxu0 0.0
    %251 = vmatpush1.msra.mxu0 0.0
    %252 = vmatprep.subr.mxu0 0.0
    %253 = vmatpush1.msra.mxu0 0.0
    %254 = vmatprep.subr.mxu0 0.0
    %255 = vmatpush1.msra.mxu0 0.0
    %256 = vmatprep.subr.mxu0 0.0
    %257 = vmatpush1.msra.mxu0 0.0
    %258 = vmatprep.subr.mxu0 0.0
    %259 = vmatpush1.msra.mxu0 0.0
    %260 = vmatprep.subr.mxu0 0.0
    %261 = vmatpush1.msra.mxu0 0.0
    %262 = vmatprep.mubr.f32.mxu0 0.0
    %263 = vmatmul.mubr.f32.gmra.mrb[0].mxu0 %v181
    %v264 = vpop.f32.mrb[0].mxu0
    %v265 = vadd.f32 %v177, %v264
    %v266 = vpop.f32.mrb[0].mxu0
    %267 = vmatprep.mubr.f32.mxu0 0.0
    %268 = vmatmul.mubr.f32.gmra.mrb[0].mxu0 %v184
    %v269 = vpop.f32.mrb[0].mxu0
    %v270 = vadd.f32 %v177, %v269
    %v271 = vpop.f32.mrb[0].mxu0
    %272 = vmatprep.mubr.f32.mxu0 0.0
    %273 = vmatmul.mubr.f32.gmra.mrb[0].mxu0 %v187
    %v274 = vpop.f32.mrb[0].mxu0
    %v275 = vadd.f32 %v177, %v274
    %v276 = vpop.f32.mrb[0].mxu0
    %277 = vmatprep.mubr.f32.mxu0 0.0
    %278 = vmatmul.mubr.f32.gmra.mrb[0].mxu0 %v190
    %v279 = vpop.f32.mrb[0].mxu0
    %v280 = vadd.f32 %v177, %v279
    %v281 = vpop.f32.mrb[0].mxu0
    %282 = vmatprep.mubr.f32.mxu0 0.0
    %283 = vmatmul.mubr.f32.gmra.mrb[0].mxu0 %v193
    %v284 = vpop.f32.mrb[0].mxu0
    %v285 = vadd.f32 %v177, %v284
    %v286 = vpop.f32.mrb[0].mxu0
    %287 = vmatprep.mubr.f32.mxu0 0.0
    %288 = vmatmul.mubr.f32.gmra.mrb[0].mxu0 %v196
    %v289 = vpop.f32.mrb[0].mxu0
    %v290 = vadd.f32 %v177, %v289
    %v291 = vpop.f32.mrb[0].mxu0
    %292 = vdwg.mxu0
    %v293 = vtanh.pop %v265
    %v294 = vtanh.pop %v270
    %v295 = vtanh.pop %v275
    %v296 = vtanh.pop %v280
    %v297 = vtanh.pop %v285
    %v298 = vtanh.pop %v290
    %v299 = vld [vmem:[%s3] sm:$0xff]
    %v300 = vld [vmem:[%s3 + $0x8] sm:$0xff]
    %v301 = vld [vmem:[%s3 + $0x10] sm:$0xff]
    %v302 = vld [vmem:[%s3 + $0x18] sm:$0xff]
    %s303 = scalar_lea.vmem %s4, 2
    %v304 = vld [vmem:[%s303] sm:$0x1]
    %v306 = vlaneseq
    %v307 = vshrl.u32 %v306, 7
    %v308 = vsub.s32 0, %v307
    %v309 = vrot.slane %v304, %v308
    %v312 = vsel %vm179, %v293, 0
    %v315 = vsel %vm179, %v294, 0
    %v318 = vsel %vm179, %v295, 0
    %v321 = vsel %vm179, %v296, 0
    %v324 = vsel %vm179, %v297, 0
    %v327 = vsel %vm179, %v298, 0
    %329 = vmatprep.subr.mxu0 0.0
    %330 = vmatpush1.msra.mxu0 %v299
    %331 = vmatprep.subr.mxu0 0.0
    %332 = vmatpush1.msra.mxu0 %v300
    %333 = vmatprep.subr.mxu0 0.0
    %334 = vmatpush1.msra.mxu0 %v301
    %335 = vmatprep.subr.mxu0 0.0
    %336 = vmatpush1.msra.mxu0 %v302
    %337 = vmatprep.subr.mxu0 0.0
    %338 = vmatpush1.msra.mxu0 0.0
    %339 = vmatprep.subr.mxu0 0.0
    %340 = vmatpush1.msra.mxu0 0.0
    %341 = vmatprep.subr.mxu0 0.0
    %342 = vmatpush1.msra.mxu0 0.0
    %343 = vmatprep.subr.mxu0 0.0
    %344 = vmatpush1.msra.mxu0 0.0
    %345 = vmatprep.subr.mxu0 0.0
    %346 = vmatpush1.msra.mxu0 0.0
    %347 = vmatprep.subr.mxu0 0.0
    %348 = vmatpush1.msra.mxu0 0.0
    %349 = vmatprep.subr.mxu0 0.0
    %350 = vmatpush1.msra.mxu0 0.0
    %351 = vmatprep.subr.mxu0 0.0
    %352 = vmatpush1.msra.mxu0 0.0
    %353 = vmatprep.subr.mxu0 0.0
    %354 = vmatpush1.msra.mxu0 0.0
    %355 = vmatprep.subr.mxu0 0.0
    %356 = vmatpush1.msra.mxu0 0.0
    %357 = vmatprep.subr.mxu0 0.0
    %358 = vmatpush1.msra.mxu0 0.0
    %359 = vmatprep.subr.mxu0 0.0
    %360 = vmatpush1.msra.mxu0 0.0
    %361 = vmatprep.subr.mxu0 0.0
    %362 = vmatpush1.msra.mxu0 0.0
    %363 = vmatprep.subr.mxu0 0.0
    %364 = vmatpush1.msra.mxu0 0.0
    %365 = vmatprep.subr.mxu0 0.0
    %366 = vmatpush1.msra.mxu0 0.0
    %367 = vmatprep.subr.mxu0 0.0
    %368 = vmatpush1.msra.mxu0 0.0
    %369 = vmatprep.subr.mxu0 0.0
    %370 = vmatpush1.msra.mxu0 0.0
    %371 = vmatprep.subr.mxu0 0.0
    %372 = vmatpush1.msra.mxu0 0.0
    %373 = vmatprep.subr.mxu0 0.0
    %374 = vmatpush1.msra.mxu0 0.0
    %375 = vmatprep.subr.mxu0 0.0
    %376 = vmatpush1.msra.mxu0 0.0
    %377 = vmatprep.subr.mxu0 0.0
    %378 = vmatpush1.msra.mxu0 0.0
    %379 = vmatprep.subr.mxu0 0.0
    %380 = vmatpush1.msra.mxu0 0.0
    %381 = vmatprep.subr.mxu0 0.0
    %382 = vmatpush1.msra.mxu0 0.0
    %383 = vmatprep.subr.mxu0 0.0
    %384 = vmatpush1.msra.mxu0 0.0
    %385 = vmatprep.subr.mxu0 0.0
    %386 = vmatpush1.msra.mxu0 0.0
    %387 = vmatprep.subr.mxu0 0.0
    %388 = vmatpush1.msra.mxu0 0.0
    %389 = vmatprep.subr.mxu0 0.0
    %390 = vmatpush1.msra.mxu0 0.0
    %391 = vmatprep.subr.mxu0 0.0
    %392 = vmatpush1.msra.mxu0 0.0
    %393 = vmatprep.mubr.f32.mxu0 0.0
    %394 = vmatmul.mubr.f32.gmra.mrb[0].mxu0 %v312
    %v395 = vpop.f32.mrb[0].mxu0
    %v396 = vadd.f32 %v309, %v395
    %v397 = vpop.f32.mrb[0].mxu0
    %398 = vmatprep.mubr.f32.mxu0 0.0
    %399 = vmatmul.mubr.f32.gmra.mrb[0].mxu0 %v315
    %v400 = vpop.f32.mrb[0].mxu0
    %v401 = vadd.f32 %v309, %v400
    %v402 = vpop.f32.mrb[0].mxu0
    %403 = vmatprep.mubr.f32.mxu0 0.0
    %404 = vmatmul.mubr.f32.gmra.mrb[0].mxu0 %v318
    %v405 = vpop.f32.mrb[0].mxu0
    %v406 = vadd.f32 %v309, %v405
    %v407 = vpop.f32.mrb[0].mxu0
    %408 = vmatprep.mubr.f32.mxu0 0.0
    %409 = vmatmul.mubr.f32.gmra.mrb[0].mxu0 %v321
    %v410 = vpop.f32.mrb[0].mxu0
    %v411 = vadd.f32 %v309, %v410
    %v412 = vpop.f32.mrb[0].mxu0
    %413 = vmatprep.mubr.f32.mxu0 0.0
    %414 = vmatmul.mubr.f32.gmra.mrb[0].mxu0 %v324
    %v415 = vpop.f32.mrb[0].mxu0
    %v416 = vadd.f32 %v309, %v415
    %v417 = vpop.f32.mrb[0].mxu0
    %418 = vmatprep.mubr.f32.mxu0 0.0
    %419 = vmatmul.mubr.f32.gmra.mrb[0].mxu0 %v327
    %v420 = vpop.f32.mrb[0].mxu0
    %v421 = vadd.f32 %v309, %v420
    %v422 = vpop.f32.mrb[0].mxu0
    %423 = vdwg.mxu0
    %424 = vst [vmem:[#allocation5] sm:$0xff] %v396
    %425 = vst [vmem:[#allocation5 + $0x8] sm:$0xff] %v401
    %426 = vst [vmem:[#allocation5 + $0x10] sm:$0xff] %v406
    %427 = vst [vmem:[#allocation5 + $0x18] sm:$0xff] %v411
    %428 = vst [vmem:[#allocation5 + $0x20] sm:$0xff] %v416
    %429 = vst [vmem:[#allocation5 + $0x28] sm:$0xff] %v421
    // Predicated region
    $region26: #{tpu_custom_call.1} parent=1 // pred_check
      _
    $region27: #{tpu_custom_call.1} parent=1 // pred_check_branch
      %431 = sbr.rel (0) target = $region29
    $region28: #{tpu_custom_call.1} parent=1 // pred_region
      %s433 = ssub.s32 768, 768
      %434 = vsyncadd [#allocation4], %s433
      %s435 = sshll.u32 [#allocation5], 4
      %s436 = int_to_ptr.vmem [resolvable:$true] %s435
      %441 = dma.vmem_to_hbm [thread:$0]  %s436, 768, %s5, [#allocation4], 128, 128, 8
    $region29: #{tpu_custom_call.1} parent=1 // pred_fallthru
      _
    // Predicated region
    $region30: #{tpu_custom_call.1} parent=1 // pred_check
      _
    $region31: #{tpu_custom_call.1} parent=1 // pred_check_branch
      %443 = sbr.rel (0) target = $region33
    $region32: #{tpu_custom_call.1} parent=1 // pred_region
      %444 = dma.done [#allocation4], 768
    $region33: #{tpu_custom_call.1} parent=1 // pred_fallthru
      _
    %445 = vsyncpa [#allocation3], 1
    %446 = vsyncpa [#allocation4], 1

</llo_original>
